<compile_context>
chip_gen: v5e
topology: v5e:2x2
jax: 0.10.0
libtpu: 0.0.40
codegen_flags: <defaults>
</compile_context>

<pallas_src>
import math

import jax
import jax.numpy as jnp
from jax.experimental import pallas as pl
from jax.experimental.pallas import tpu as pltpu


def _round_up(x, m):
    return (x + m - 1) // m * m


def _pick_tiles(n):
    """Pick (Np, TM, TK) for the GCN2 layer kernel.

    TK (adjacency lane width) is pushed toward 2048 so each adj DMA row is
    >= 4 KiB contiguous in HBM; TM (row block) toward 1024 so x re-streaming
    is ~12.5% of the adj bytes.  Working set (double-buffered adj tile + x
    slab + x0 + out + f32 acc + W1) stays ~10 MiB, well inside v7x's 64 MiB
    VMEM/TC and leaving Np/TM >= 2 at large N so the parallel row axis still
    splits across both v7x TensorCores.
    """
    np_n = _round_up(max(n, 256), 256)
    if np_n <= 2048:
        tk = np_n                      # whole padded width in one slab
        tm = min(1024, np_n)
        if np_n % tm != 0:
            tm = np_n                  # fall back to a single row block
    else:
        tk = 2048
        tm = 1024
        np_n = _round_up(np_n, 2048)   # divisible by both TM and TK
    return np_n, tm, tk


# --------------------------- lin0 + ReLU kernel ----------------------------- #

def _linear_relu_kernel(x_ref, w_ref, b_ref, o_ref):
    y = jnp.dot(x_ref[...], w_ref[...], preferred_element_type=jnp.float32)
    y = y + b_ref[...]
    o_ref[...] = jnp.maximum(y, 0.0).astype(o_ref.dtype)


def linear_relu(x, w, b, *, tm, out_dtype=jnp.bfloat16):
    """relu(x @ w + b), tiled over rows.  w: [in, out_padded] (lane-dense)."""
    n, in_ch = x.shape
    hp = w.shape[1]
    return pl.pallas_call(
        _linear_relu_kernel,
        grid=(n // tm,),
        in_specs=[
            pl.BlockSpec((tm, in_ch), lambda i: (i, 0)),
            pl.BlockSpec((in_ch, hp), lambda i: (0, 0)),   # resident weight
            pl.BlockSpec((1, hp), lambda i: (0, 0)),       # resident bias
        ],
        out_specs=pl.BlockSpec((tm, hp), lambda i: (i, 0)),
        out_shape=jax.ShapeDtypeStruct((n, hp), out_dtype),
        compiler_params=pltpu.CompilerParams(
            dimension_semantics=("parallel",),
            vmem_limit_bytes=48 * 1024 * 1024,
        ),
    )(x, w, b)


# --------------------------- GCN2Conv + BN + ReLU --------------------------- #

def _gcn2_layer_kernel(scal_ref, adj_ref, x_ref, x0_ref, w_ref, scale_ref,
                       bias_ref, o_ref, acc_ref):
    k = pl.program_id(1)

    @pl.when(k == 0)
    def _():
        # adj is pre-scaled by (1 - alpha) on the host, so seeding the f32
        # accumulator with alpha * x0 makes the GCN2 combine implicit.
        acc_ref[...] = scal_ref[0] * x0_ref[...].astype(jnp.float32)

    # propagate: row tile of (1-alpha)*adj_t times k-slab of x, f32 MXU acc.
    acc_ref[...] += jnp.dot(adj_ref[...], x_ref[...],
                            preferred_element_type=jnp.float32)

    @pl.when(k == pl.num_programs(1) - 1)
    def _():
        beta_l = scal_ref[1]
        h = acc_ref[...]                     # = (1-alpha) * A @ x + alpha * x0
        # identity-mapping mix (shared_weights=True); bf16 MXU, f32 accumulate
        hw = jnp.dot(h.astype(jnp.bfloat16), w_ref[...],
                     preferred_element_type=jnp.float32)
        out = h + beta_l * (hw - h)          # (1-beta)*h + beta*(h@W1)
        # folded BatchNorm (eval, running stats) + ReLU, f32 epilogue
        out = out * scale_ref[...] + bias_ref[...]
        o_ref[...] = jnp.maximum(out, 0.0).astype(o_ref.dtype)


def gcn2_layer(scalars, adj_t, x, x0, w1, bn_scale, bn_bias, *, tm, tk):
    """One GCNII layer on padded shapes: adj_t [Np,Np] bf16, x/x0 [Np,Hp] bf16."""
    n, hp = x.shape
    grid = (n // tm, n // tk)
    flops = int(2 * n * n * hp + 2 * n * hp * hp)
    bytes_accessed = int(
        n * n * 2                         # adj_t (bf16), streamed once
        + (n // tm) * n * hp * 2          # x re-streamed per row block
        + n * hp * 2                      # x0
        + n * hp * 2                      # output
        + hp * hp * 2 + 2 * hp * 4        # W1 (bf16) + folded BN (resident)
    )
    return pl.pallas_call(
        _gcn2_layer_kernel,
        grid=grid,
        in_specs=[
            pl.BlockSpec(memory_space=pltpu.MemorySpace.SMEM),   # [alpha, beta_l]
            pl.BlockSpec((tm, tk), lambda i, k: (i, k)),         # adj_t tile
            pl.BlockSpec((tk, hp), lambda i, k: (k, 0)),         # x k-slab
            pl.BlockSpec((tm, hp), lambda i, k: (i, 0)),         # x0 row tile (resident over k)
            pl.BlockSpec((hp, hp), lambda i, k: (0, 0)),         # W1 (resident)
            pl.BlockSpec((1, hp), lambda i, k: (0, 0)),          # BN scale (resident)
            pl.BlockSpec((1, hp), lambda i, k: (0, 0)),          # BN bias (resident)
        ],
        out_specs=pl.BlockSpec((tm, hp), lambda i, k: (i, 0)),
        out_shape=jax.ShapeDtypeStruct((n, hp), x.dtype),
        scratch_shapes=[pltpu.VMEM((tm, hp), jnp.float32)],
        compiler_params=pltpu.CompilerParams(
            dimension_semantics=("parallel", "arbitrary"),
            # ~10 MiB working set at TM=1024/TK=2048; 48 MiB scoped limit keeps
            # double-buffering alive on every gen and stays under v7x's 64 MiB.
            vmem_limit_bytes=48 * 1024 * 1024,
        ),
        cost_estimate=pl.CostEstimate(
            flops=flops, transcendentals=0, bytes_accessed=bytes_accessed),
    )(scalars, adj_t, x, x0, w1, bn_scale, bn_bias)


# ------------------------------- JAX glue ----------------------------------- #

def build_norm_adj_t(edge_index, n, np_n, *, scale=1.0, dtype=jnp.bfloat16):
    """gcn_norm (improved=False, add_self_loops=True) + transposed dense adjacency.

    Reproduces: edge_index, w = gcn_norm(edge_index, None, n, False)
                adj_t = SparseTensor(row=col, col=row, value=w, (n, n))
    assuming the input graph has no pre-existing self loops.  The matrix is
    scattered straight into its final padded [Np, Np] shape and pre-scaled by
    `scale` (= 1 - alpha) before the single cast to the streaming dtype.
    """
    row, col = edge_index[0], edge_index[1]
    loop = jnp.arange(n, dtype=row.dtype)
    row = jnp.concatenate([row, loop])
    col = jnp.concatenate([col, loop])
    w = jnp.ones(row.shape[0], dtype=jnp.float32)
    deg = jnp.zeros((n,), dtype=jnp.float32).at[col].add(w)
    dinv = jnp.where(deg > 0, jax.lax.rsqrt(deg), jnp.zeros_like(deg))
    w = dinv[row] * w * dinv[col] * jnp.float32(scale)
    # adj_t[col, row] = w, written directly into the padded buffer
    adj = jnp.zeros((np_n, np_n), dtype=jnp.float32).at[col, row].add(w)
    return adj.astype(dtype)


def gcnii_forward(x, edge_index, params, *, alpha, theta, eps=1e-5):
    """GCNII forward pass (eval semantics).  Dropout == identity, BN uses running stats."""
    n, _ = x.shape
    h_dim = params["w0"].shape[1]
    hp = _round_up(h_dim, 128)
    np_n, tm, tk = _pick_tiles(n)

    # ---- host-side prep: normalized adjacency (pre-scaled by 1-alpha), padding ----
    adj = build_norm_adj_t(edge_index, n, np_n, scale=1.0 - alpha,
                           dtype=jnp.bfloat16)
    xp = jnp.pad(x.astype(jnp.float32), ((0, np_n - n), (0, 0))).astype(jnp.bfloat16)

    w0 = jnp.pad(params["w0"].astype(jnp.float32),
                 ((0, 0), (0, hp - h_dim))).astype(jnp.bfloat16)
    b0 = jnp.pad(params["b0"].astype(jnp.float32).reshape(1, -1),
                 ((0, 0), (0, hp - h_dim)))

    # x = x0 = relu(lin0(x))   (Pallas, tiled rows, lane-dense padded output)
    h = linear_relu(xp, w0, b0, tm=tm)
    x0 = h

    for l, (w1, gamma, beta, mean, var) in enumerate(params["convs"]):
        beta_l = math.log(theta / (l + 1) + 1.0)
        scalars = jnp.array([alpha, beta_l], dtype=jnp.float32)
        # fold BatchNorm(eval) into a single scale/bias pair outside the kernel
        scale = gamma.astype(jnp.float32) * jax.lax.rsqrt(var.astype(jnp.float32) + eps)
        bias = beta.astype(jnp.float32) - mean.astype(jnp.float32) * scale
        scale_p = jnp.pad(scale.reshape(1, -1), ((0, 0), (0, hp - h_dim)),
                          constant_values=1.0)
        bias_p = jnp.pad(bias.reshape(1, -1), ((0, 0), (0, hp - h_dim)))
        w1p = jnp.pad(w1.astype(jnp.float32),
                      ((0, hp - h_dim), (0, hp - h_dim))).astype(jnp.bfloat16)
        h = gcn2_layer(scalars, adj, h, x0, w1p, scale_p, bias_p, tm=tm, tk=tk)

    # Final linear: OUT_CH is tiny (<< 128 lanes) so a Pallas kernel would be all
    # masked stores -> leave it to XLA.
    out = h[:n, :h_dim].astype(jnp.float32) @ params["w1"] + params["b1"]
    return out


# ------------------------------- Demo / check ------------------------------- #

def _reference_forward(x, edge_index, params, *, alpha, theta, eps=1e-5):
    """Pure-JAX f32 reference for validation (eval semantics)."""
    n = x.shape[0]
    adj = build_norm_adj_t(edge_index, n, n, scale=1.0, dtype=jnp.float32)
    h = jnp.maximum(x @ params["w0"] + params["b0"], 0.0)
    x0 = h
    for l, (w1, gamma, beta, mean, var) in enumerate(params["convs"]):
        beta_l = math.log(theta / (l + 1) + 1.0)
        ax = adj @ h
        hh = (1.0 - alpha) * ax + alpha * x0
        out = (1.0 - beta_l) * hh + beta_l * (hh @ w1)
        out = (out - mean) * jax.lax.rsqrt(var + eps) * gamma + beta
        h = jnp.maximum(out, 0.0)
    return h @ params["w1"] + params["b1"]


if __name__ == "__main__":
    N = 200          # number of graph nodes (padded to 256 internally)
    IN_CH = 8
    HIDDEN = 32      # padded to 128 lanes internally
    OUT_CH = 4
    NUM_LAYERS = 2
    ALPHA = 0.1
    THETA = 0.5

    key = jax.random.PRNGKey(0)
    k_x, k_w0, k_b0, k_conv, k_w1, k_b1, k_bn = jax.random.split(key, 7)

    x = jax.random.normal(k_x, (N, IN_CH), dtype=jnp.float32)

    # deterministic ring graph (bidirectional, no self loops)
    src = jnp.arange(N, dtype=jnp.int32)
    dst = (src + 1) % N
    edge_index = jnp.stack([jnp.concatenate([src, dst]),
                            jnp.concatenate([dst, src])])  # [2, 2N]

    # deterministic parameter init (weights stored pre-transposed: [in, out])
    params = {
        "w0": jax.random.normal(k_w0, (IN_CH, HIDDEN), jnp.float32) / jnp.sqrt(IN_CH),
        "b0": jax.random.normal(k_b0, (HIDDEN,), jnp.float32) * 0.01,
        "w1": jax.random.normal(k_w1, (HIDDEN, OUT_CH), jnp.float32) / jnp.sqrt(HIDDEN),
        "b1": jax.random.normal(k_b1, (OUT_CH,), jnp.float32) * 0.01,
        "convs": [],
    }
    for l in range(NUM_LAYERS):
        kw = jax.random.fold_in(k_conv, l)
        kb = jax.random.fold_in(k_bn, l)
        kb1, kb2, kb3, kb4 = jax.random.split(kb, 4)
        w1 = jax.random.normal(kw, (HIDDEN, HIDDEN), jnp.float32) / jnp.sqrt(HIDDEN)
        gamma = 1.0 + 0.1 * jax.random.normal(kb1, (HIDDEN,), jnp.float32)   # BN weight
        beta = 0.1 * jax.random.normal(kb2, (HIDDEN,), jnp.float32)          # BN bias
        mean = 0.1 * jax.random.normal(kb3, (HIDDEN,), jnp.float32)          # BN running_mean
        var = 1.0 + 0.1 * jax.random.uniform(kb4, (HIDDEN,), jnp.float32)    # BN running_var
        params["convs"].append((w1, gamma, beta, mean, var))

    out = gcnii_forward(x, edge_index, params, alpha=ALPHA, theta=THETA)
    out = jax.block_until_ready(out)
    assert out.shape == (N, OUT_CH)
    assert bool(jnp.all(jnp.isfinite(out)))

    ref = jax.block_until_ready(
        _reference_forward(x, edge_index, params, alpha=ALPHA, theta=THETA))
    # bf16 streaming of adj / activations / W1 -> generous tolerance vs. f32 reference.
    assert bool(jnp.allclose(out, ref, atol=0.1, rtol=0.1)), "mismatch vs f32 reference"

    print("KERNEL_OK")
</pallas_src>

<mosaic_0001>
module attributes {stable_mosaic.version = 11 : i64} {
  func.func @_linear_relu_kernel(%arg0: i32, %arg1: memref<256x8xbf16, #tpu.memory_space<vmem>>, %arg2: memref<8x128xbf16, #tpu.memory_space<vmem>>, %arg3: memref<1x128xf32, #tpu.memory_space<vmem>>, %arg4: memref<256x128xbf16, #tpu.memory_space<vmem>>) attributes {dimension_semantics = [#tpu.dimension_semantics<parallel>], iteration_bounds = array<i64: 1>, scalar_prefetch = 0 : i64, scratch_operands = 0 : i64, tpu.core_type = #tpu.core_type<tc>, window_params = [{transform_indices = @transform_0, window_bounds = array<i64: 256, 8>}, {pipeline_mode = #tpu.pipeline_mode<synchronous>, transform_indices = @transform_1, window_bounds = array<i64: 8, 128>}, {pipeline_mode = #tpu.pipeline_mode<synchronous>, transform_indices = @transform_2, window_bounds = array<i64: 1, 128>}, {transform_indices = @transform_3, window_bounds = array<i64: 256, 128>}]} {
    %c0 = arith.constant 0 : index
    %c0_0 = arith.constant 0 : index
    %0 = vector.load %arg1[%c0, %c0_0] : memref<256x8xbf16, #tpu.memory_space<vmem>>, vector<256x8xbf16>
    %c0_1 = arith.constant 0 : index
    %c0_2 = arith.constant 0 : index
    %1 = vector.load %arg2[%c0_1, %c0_2] : memref<8x128xbf16, #tpu.memory_space<vmem>>, vector<8x128xbf16>
    %cst = arith.constant dense<0.000000e+00> : vector<256x128xf32>
    %2 = tpu.matmul %0, %1, %cst {dimension_numbers = #tpu.dot_dimension_numbers<[1], [0], [0], [1], [0, 0, 1, 1], [], []>} : vector<256x8xbf16>, vector<8x128xbf16>, vector<256x128xf32> -> vector<256x128xf32>
    %c0_3 = arith.constant 0 : index
    %c0_4 = arith.constant 0 : index
    %3 = vector.load %arg3[%c0_3, %c0_4] : memref<1x128xf32, #tpu.memory_space<vmem>>, vector<1x128xf32>
    %4 = vector.broadcast %3 : vector<1x128xf32> to vector<256x128xf32>
    %5 = arith.addf %2, %4 : vector<256x128xf32>
    %cst_5 = arith.constant 0.000000e+00 : f32
    %6 = vector.broadcast %cst_5 : f32 to vector<256x128xf32>
    %7 = arith.maximumf %5, %6 : vector<256x128xf32>
    %8 = arith.truncf %7 : vector<256x128xf32> to vector<256x128xbf16>
    %c0_6 = arith.constant 0 : index
    %c0_7 = arith.constant 0 : index
    %9 = vector.load %arg4[%c0_6, %c0_7] : memref<256x128xbf16, #tpu.memory_space<vmem>>, vector<256x128xbf16>
    tpu.vector_store %arg4[%c0_6, %c0_7], %8 {strides = array<i32>} : memref<256x128xbf16, #tpu.memory_space<vmem>>, vector<256x128xbf16>,
    return
  }
  func.func @transform_0(%arg0: i32) -> (i32, i32) {
    %c0_i32 = arith.constant 0 : i32
    %c0_i32_0 = arith.constant 0 : i32
    return %arg0, %c0_i32 : i32, i32
  }
  func.func @transform_1(%arg0: i32) -> (i32, i32) {
    %c0_i32 = arith.constant 0 : i32
    %c0_i32_0 = arith.constant 0 : i32
    %c0_i32_1 = arith.constant 0 : i32
    return %c0_i32, %c0_i32_0 : i32, i32
  }
  func.func @transform_2(%arg0: i32) -> (i32, i32) {
    %c0_i32 = arith.constant 0 : i32
    %c0_i32_0 = arith.constant 0 : i32
    %c0_i32_1 = arith.constant 0 : i32
    return %c0_i32, %c0_i32_0 : i32, i32
  }
  func.func @transform_3(%arg0: i32) -> (i32, i32) {
    %c0_i32 = arith.constant 0 : i32
    %c0_i32_0 = arith.constant 0 : i32
    return %arg0, %c0_i32 : i32, i32
  }
}

</mosaic_0001>

<llo_original>
// kernel: tpu_custom_call.1
$region0: #{tpu_custom_call.1}
  #allocation0 [shape = 'u32[]', space=smem, size = 0x4, offset = 0x4, fixed_abs, tag = 'smem constant byte address 0x4 - core index']
  #allocation1 [shape = 'u32[72,128]{1,0:T(1,128)}', space=vmem, size = 0x9000, scoped, tag = 'internal scratch']
  %s0 = inlined_call_operand.vmem [shape: bf16[256,8], index: 0, kind: input, shape index: {}]
  %s1 = inlined_call_operand.vmem [shape: bf16[8,128], index: 1, kind: input, shape index: {}]
  %s2 = inlined_call_operand.vmem [shape: f32[1,128], index: 2, kind: input, shape index: {}]
  %s3 = inlined_call_operand.hbm [shape: bf16[256,128], index: 3, kind: output, shape index: {}]
  %s4 = sld [smem:[#allocation0]]
  $region22: #{tpu_custom_call.1} parent=0
    _
  %s6 = ssub.s32 1, %s4
  %s7 = scalar_select 0, %s6, %s4
  $region1: #{tpu_custom_call.1} parent=0
    #allocation2 [shape = 'u8[65536]{0}', space=vmem, size = 0x10000, scoped, tag = 'output window, operand 0, single buffered']
    #allocation3 [shape = 's32[1]{0}', space=sflag, size = 0x4, scoped, tag = 'scoped memory for tpu_custom_call.1']
    %8 = vsyncpa [#allocation3], 0
    // Predicated region
    $region2: #{tpu_custom_call.1} parent=1 // pred_check
      _
    $region3: #{tpu_custom_call.1} parent=1 // pred_check_branch
      %10 = sbr.rel (0) target = $region5
    $region4: #{tpu_custom_call.1} parent=1 // pred_region
      _
    $region5: #{tpu_custom_call.1} parent=1 // pred_fallthru
      _
    // Predicated region
    $region6: #{tpu_custom_call.1} parent=1 // pred_check
      _
    $region7: #{tpu_custom_call.1} parent=1 // pred_check_branch
      %12 = sbr.rel (0) target = $region9
    $region8: #{tpu_custom_call.1} parent=1 // pred_region
      _
    $region9: #{tpu_custom_call.1} parent=1 // pred_fallthru
      _
    // Predicated region
    $region10: #{tpu_custom_call.1} parent=1 // pred_check
      _
    $region11: #{tpu_custom_call.1} parent=1 // pred_check_branch
      %14 = sbr.rel (0) target = $region13
    $region12: #{tpu_custom_call.1} parent=1 // pred_region
      _
    $region13: #{tpu_custom_call.1} parent=1 // pred_fallthru
      _
    %v16 = vld [vmem:[%s0] sm:$0xf]
    %v17 = vld [vmem:[%s0 + $0x4] sm:$0xf]
    %v18 = vld [vmem:[%s0 + $0x8] sm:$0xf]
    %v19 = vld [vmem:[%s0 + $0xc] sm:$0xf]
    %v20 = vld [vmem:[%s0 + $0x10] sm:$0xf]
    %v21 = vld [vmem:[%s0 + $0x14] sm:$0xf]
    %v22 = vld [vmem:[%s0 + $0x18] sm:$0xf]
    %v23 = vld [vmem:[%s0 + $0x1c] sm:$0xf]
    %v24 = vld [vmem:[%s0 + $0x20] sm:$0xf]
    %v25 = vld [vmem:[%s0 + $0x24] sm:$0xf]
    %v26 = vld [vmem:[%s0 + $0x28] sm:$0xf]
    %v27 = vld [vmem:[%s0 + $0x2c] sm:$0xf]
    %v28 = vld [vmem:[%s0 + $0x30] sm:$0xf]
    %v29 = vld [vmem:[%s0 + $0x34] sm:$0xf]
    %v30 = vld [vmem:[%s0 + $0x38] sm:$0xf]
    %v31 = vld [vmem:[%s0 + $0x3c] sm:$0xf]
    %v32 = vld [vmem:[%s0 + $0x40] sm:$0xf]
    %v33 = vld [vmem:[%s0 + $0x44] sm:$0xf]
    %v34 = vld [vmem:[%s0 + $0x48] sm:$0xf]
    %v35 = vld [vmem:[%s0 + $0x4c] sm:$0xf]
    %v36 = vld [vmem:[%s0 + $0x50] sm:$0xf]
    %v37 = vld [vmem:[%s0 + $0x54] sm:$0xf]
    %v38 = vld [vmem:[%s0 + $0x58] sm:$0xf]
    %v39 = vld [vmem:[%s0 + $0x5c] sm:$0xf]
    %v40 = vld [vmem:[%s0 + $0x60] sm:$0xf]
    %v41 = vld [vmem:[%s0 + $0x64] sm:$0xf]
    %v42 = vld [vmem:[%s0 + $0x68] sm:$0xf]
    %v43 = vld [vmem:[%s0 + $0x6c] sm:$0xf]
    %v44 = vld [vmem:[%s0 + $0x70] sm:$0xf]
    %v45 = vld [vmem:[%s0 + $0x74] sm:$0xf]
    %v46 = vld [vmem:[%s0 + $0x78] sm:$0xf]
    %v47 = vld [vmem:[%s0 + $0x7c] sm:$0xf]
    %v48 = vld [vmem:[%s1] sm:$0xf]
    %v49 = vld [vmem:[%s2] sm:$0x1]
    %v51 = vperm.slane %v49, 0
    %v85 = vunpack.c.l.b16 %v16
    %v86 = vunpack.c.l.b16 %v17
    %v87 = vunpack.c.l.b16 %v18
    %v88 = vunpack.c.l.b16 %v19
    %v89 = vunpack.c.l.b16 %v20
    %v90 = vunpack.c.l.b16 %v21
    %v91 = vunpack.c.l.b16 %v22
    %v92 = vunpack.c.l.b16 %v23
    %v93 = vunpack.c.l.b16 %v24
    %v94 = vunpack.c.l.b16 %v25
    %v95 = vunpack.c.l.b16 %v26
    %v96 = vunpack.c.l.b16 %v27
    %v97 = vunpack.c.l.b16 %v28
    %v98 = vunpack.c.l.b16 %v29
    %v99 = vunpack.c.l.b16 %v30
    %v100 = vunpack.c.l.b16 %v31
    %v101 = vunpack.c.l.b16 %v32
    %v102 = vunpack.c.l.b16 %v33
    %v103 = vunpack.c.l.b16 %v34
    %v104 = vunpack.c.l.b16 %v35
    %v105 = vunpack.c.l.b16 %v36
    %v106 = vunpack.c.l.b16 %v37
    %v107 = vunpack.c.l.b16 %v38
    %v108 = vunpack.c.l.b16 %v39
    %v109 = vunpack.c.l.b16 %v40
    %v110 = vunpack.c.l.b16 %v41
    %v111 = vunpack.c.l.b16 %v42
    %v112 = vunpack.c.l.b16 %v43
    %v113 = vunpack.c.l.b16 %v44
    %v114 = vunpack.c.l.b16 %v45
    %v115 = vunpack.c.l.b16 %v46
    %v116 = vunpack.c.l.b16 %v47
    %v117 = vpack.c.b16 %v86, %v85
    %v118 = vpack.c.b16 %v88, %v87
    %v119 = vpack.c.b16 %v90, %v89
    %v120 = vpack.c.b16 %v92, %v91
    %v121 = vpack.c.b16 %v94, %v93
    %v122 = vpack.c.b16 %v96, %v95
    %v123 = vpack.c.b16 %v98, %v97
    %v124 = vpack.c.b16 %v100, %v99
    %v125 = vpack.c.b16 %v102, %v101
    %v126 = vpack.c.b16 %v104, %v103
    %v127 = vpack.c.b16 %v106, %v105
    %v128 = vpack.c.b16 %v108, %v107
    %v129 = vpack.c.b16 %v110, %v109
    %v130 = vpack.c.b16 %v112, %v111
    %v131 = vpack.c.b16 %v114, %v113
    %v132 = vpack.c.b16 %v116, %v115
    %vm133 = vcmask 64512
    %v135 = vsel %vm133, %v117, 0
    %v138 = vsel %vm133, %v118, 0
    %v141 = vsel %vm133, %v119, 0
    %v144 = vsel %vm133, %v120, 0
    %v147 = vsel %vm133, %v121, 0
    %v150 = vsel %vm133, %v122, 0
    %v153 = vsel %vm133, %v123, 0
    %v156 = vsel %vm133, %v124, 0
    %v159 = vsel %vm133, %v125, 0
    %v162 = vsel %vm133, %v126, 0
    %v165 = vsel %vm133, %v127, 0
    %v168 = vsel %vm133, %v128, 0
    %v171 = vsel %vm133, %v129, 0
    %v174 = vsel %vm133, %v130, 0
    %v177 = vsel %vm133, %v131, 0
    %v180 = vsel %vm133, %v132, 0
    %vm182 = vcmask 1043456
    %v184 = vsel %vm182, %v48, 0
    %186 = vmatpush.bf16.msra.mxu0 0
    %187 = vmatpush.bf16.msra.mxu0 0
    %188 = vmatpush.bf16.msra.mxu0 0
    %189 = vmatpush.bf16.msra.mxu0 0
    %190 = vmatpush.bf16.msra.mxu0 0
    %191 = vmatpush.bf16.msra.mxu0 0
    %192 = vmatpush.bf16.msra.mxu0 0
    %193 = vmatpush.bf16.msra.mxu0 %v184
    %194 = vmatmul.bf16.gmra.mxu0 %v135
    %v195 = vpop.f32.mrf.mxu0
    %v196 = vadd.f32 %v51, %v195
    %v197 = vpop.f32.mrf.mxu0
    %v198 = vadd.f32 %v51, %v197
    %199 = vmatmul.bf16.gmra.mxu0 %v138
    %v200 = vpop.f32.mrf.mxu0
    %v201 = vadd.f32 %v51, %v200
    %v202 = vpop.f32.mrf.mxu0
    %v203 = vadd.f32 %v51, %v202
    %204 = vmatmul.bf16.gmra.mxu0 %v141
    %v205 = vpop.f32.mrf.mxu0
    %v206 = vadd.f32 %v51, %v205
    %v207 = vpop.f32.mrf.mxu0
    %v208 = vadd.f32 %v51, %v207
    %209 = vmatmul.bf16.gmra.mxu0 %v144
    %v210 = vpop.f32.mrf.mxu0
    %v211 = vadd.f32 %v51, %v210
    %v212 = vpop.f32.mrf.mxu0
    %v213 = vadd.f32 %v51, %v212
    %214 = vmatmul.bf16.gmra.mxu0 %v147
    %v215 = vpop.f32.mrf.mxu0
    %v216 = vadd.f32 %v51, %v215
    %v217 = vpop.f32.mrf.mxu0
    %v218 = vadd.f32 %v51, %v217
    %219 = vmatmul.bf16.gmra.mxu0 %v150
    %v220 = vpop.f32.mrf.mxu0
    %v221 = vadd.f32 %v51, %v220
    %v222 = vpop.f32.mrf.mxu0
    %v223 = vadd.f32 %v51, %v222
    %224 = vmatmul.bf16.gmra.mxu0 %v153
    %v225 = vpop.f32.mrf.mxu0
    %v226 = vadd.f32 %v51, %v225
    %v227 = vpop.f32.mrf.mxu0
    %v228 = vadd.f32 %v51, %v227
    %229 = vmatmul.bf16.gmra.mxu0 %v156
    %v230 = vpop.f32.mrf.mxu0
    %v231 = vadd.f32 %v51, %v230
    %v232 = vpop.f32.mrf.mxu0
    %v233 = vadd.f32 %v51, %v232
    %234 = vmatmul.bf16.gmra.mxu0 %v159
    %v235 = vpop.f32.mrf.mxu0
    %v236 = vadd.f32 %v51, %v235
    %v237 = vpop.f32.mrf.mxu0
    %v238 = vadd.f32 %v51, %v237
    %239 = vmatmul.bf16.gmra.mxu0 %v162
    %v240 = vpop.f32.mrf.mxu0
    %v241 = vadd.f32 %v51, %v240
    %v242 = vpop.f32.mrf.mxu0
    %v243 = vadd.f32 %v51, %v242
    %244 = vmatmul.bf16.gmra.mxu0 %v165
    %v245 = vpop.f32.mrf.mxu0
    %v246 = vadd.f32 %v51, %v245
    %v247 = vpop.f32.mrf.mxu0
    %v248 = vadd.f32 %v51, %v247
    %249 = vmatmul.bf16.gmra.mxu0 %v168
    %v250 = vpop.f32.mrf.mxu0
    %v251 = vadd.f32 %v51, %v250
    %v252 = vpop.f32.mrf.mxu0
    %v253 = vadd.f32 %v51, %v252
    %254 = vmatmul.bf16.gmra.mxu0 %v171
    %v255 = vpop.f32.mrf.mxu0
    %v256 = vadd.f32 %v51, %v255
    %v257 = vpop.f32.mrf.mxu0
    %v258 = vadd.f32 %v51, %v257
    %259 = vmatmul.bf16.gmra.mxu0 %v174
    %v260 = vpop.f32.mrf.mxu0
    %v261 = vadd.f32 %v51, %v260
    %v262 = vpop.f32.mrf.mxu0
    %v263 = vadd.f32 %v51, %v262
    %264 = vmatmul.bf16.gmra.mxu0 %v177
    %v265 = vpop.f32.mrf.mxu0
    %v266 = vadd.f32 %v51, %v265
    %v267 = vpop.f32.mrf.mxu0
    %v268 = vadd.f32 %v51, %v267
    %269 = vmatmul.bf16.gmra.mxu0 %v180
    %v270 = vpop.f32.mrf.mxu0
    %v271 = vadd.f32 %v51, %v270
    %v272 = vpop.f32.mrf.mxu0
    %v273 = vadd.f32 %v51, %v272
    %274 = vdwg.mxu0
    %v275 = vmax.f32 %v196, 0.0
    %v276 = vmax.f32 %v198, 0.0
    %v277 = vmax.f32 %v201, 0.0
    %v278 = vmax.f32 %v203, 0.0
    %v279 = vmax.f32 %v206, 0.0
    %v280 = vmax.f32 %v208, 0.0
    %v281 = vmax.f32 %v211, 0.0
    %v282 = vmax.f32 %v213, 0.0
    %v283 = vmax.f32 %v216, 0.0
    %v284 = vmax.f32 %v218, 0.0
    %v285 = vmax.f32 %v221, 0.0
    %v286 = vmax.f32 %v223, 0.0
    %v287 = vmax.f32 %v226, 0.0
    %v288 = vmax.f32 %v228, 0.0
    %v289 = vmax.f32 %v231, 0.0
    %v290 = vmax.f32 %v233, 0.0
    %v291 = vmax.f32 %v236, 0.0
    %v292 = vmax.f32 %v238, 0.0
    %v293 = vmax.f32 %v241, 0.0
    %v294 = vmax.f32 %v243, 0.0
    %v295 = vmax.f32 %v246, 0.0
    %v296 = vmax.f32 %v248, 0.0
    %v297 = vmax.f32 %v251, 0.0
    %v298 = vmax.f32 %v253, 0.0
    %v299 = vmax.f32 %v256, 0.0
    %v300 = vmax.f32 %v258, 0.0
    %v301 = vmax.f32 %v261, 0.0
    %v302 = vmax.f32 %v263, 0.0
    %v303 = vmax.f32 %v266, 0.0
    %v304 = vmax.f32 %v268, 0.0
    %v305 = vmax.f32 %v271, 0.0
    %v306 = vmax.f32 %v273, 0.0
    %v307 = vpack.c.bf16 %v275, %v275
    %v308 = vpack.c.bf16 %v276, %v276
    %v309 = vpack.c.bf16 %v277, %v277
    %v310 = vpack.c.bf16 %v278, %v278
    %v311 = vpack.c.bf16 %v279, %v279
    %v312 = vpack.c.bf16 %v280, %v280
    %v313 = vpack.c.bf16 %v281, %v281
    %v314 = vpack.c.bf16 %v282, %v282
    %v315 = vpack.c.bf16 %v283, %v283
    %v316 = vpack.c.bf16 %v284, %v284
    %v317 = vpack.c.bf16 %v285, %v285
    %v318 = vpack.c.bf16 %v286, %v286
    %v319 = vpack.c.bf16 %v287, %v287
    %v320 = vpack.c.bf16 %v288, %v288
    %v321 = vpack.c.bf16 %v289, %v289
    %v322 = vpack.c.bf16 %v290, %v290
    %v323 = vpack.c.bf16 %v291, %v291
    %v324 = vpack.c.bf16 %v292, %v292
    %v325 = vpack.c.bf16 %v293, %v293
    %v326 = vpack.c.bf16 %v294, %v294
    %v327 = vpack.c.bf16 %v295, %v295
    %v328 = vpack.c.bf16 %v296, %v296
    %v329 = vpack.c.bf16 %v297, %v297
    %v330 = vpack.c.bf16 %v298, %v298
    %v331 = vpack.c.bf16 %v299, %v299
    %v332 = vpack.c.bf16 %v300, %v300
    %v333 = vpack.c.bf16 %v301, %v301
    %v334 = vpack.c.bf16 %v302, %v302
    %v335 = vpack.c.bf16 %v303, %v303
    %v336 = vpack.c.bf16 %v304, %v304
    %v337 = vpack.c.bf16 %v305, %v305
    %v338 = vpack.c.bf16 %v306, %v306
    %339 = vst [vmem:[#allocation2] sm:$0xf] %v307
    %340 = vst [vmem:[#allocation2 + $0x4] sm:$0xf] %v308
    %341 = vst [vmem:[#allocation2 + $0x8] sm:$0xf] %v309
    %342 = vst [vmem:[#allocation2 + $0xc] sm:$0xf] %v310
    %343 = vst [vmem:[#allocation2 + $0x10] sm:$0xf] %v311
    %344 = vst [vmem:[#allocation2 + $0x14] sm:$0xf] %v312
    %345 = vst [vmem:[#allocation2 + $0x18] sm:$0xf] %v313
    %346 = vst [vmem:[#allocation2 + $0x1c] sm:$0xf] %v314
    %347 = vst [vmem:[#allocation2 + $0x20] sm:$0xf] %v315
    %348 = vst [vmem:[#allocation2 + $0x24] sm:$0xf] %v316
    %349 = vst [vmem:[#allocation2 + $0x28] sm:$0xf] %v317
    %350 = vst [vmem:[#allocation2 + $0x2c] sm:$0xf] %v318
    %351 = vst [vmem:[#allocation2 + $0x30] sm:$0xf] %v319
    %352 = vst [vmem:[#allocation2 + $0x34] sm:$0xf] %v320
    %353 = vst [vmem:[#allocation2 + $0x38] sm:$0xf] %v321
    %354 = vst [vmem:[#allocation2 + $0x3c] sm:$0xf] %v322
    %355 = vst [vmem:[#allocation2 + $0x40] sm:$0xf] %v323
    %356 = vst [vmem:[#allocation2 + $0x44] sm:$0xf] %v324
    %357 = vst [vmem:[#allocation2 + $0x48] sm:$0xf] %v325
    %358 = vst [vmem:[#allocation2 + $0x4c] sm:$0xf] %v326
    %359 = vst [vmem:[#allocation2 + $0x50] sm:$0xf] %v327
    %360 = vst [vmem:[#allocation2 + $0x54] sm:$0xf] %v328
    %361 = vst [vmem:[#allocation2 + $0x58] sm:$0xf] %v329
    %362 = vst [vmem:[#allocation2 + $0x5c] sm:$0xf] %v330
    %363 = vst [vmem:[#allocation2 + $0x60] sm:$0xf] %v331
    %364 = vst [vmem:[#allocation2 + $0x64] sm:$0xf] %v332
    %365 = vst [vmem:[#allocation2 + $0x68] sm:$0xf] %v333
    %366 = vst [vmem:[#allocation2 + $0x6c] sm:$0xf] %v334
    %367 = vst [vmem:[#allocation2 + $0x70] sm:$0xf] %v335
    %368 = vst [vmem:[#allocation2 + $0x74] sm:$0xf] %v336
    %369 = vst [vmem:[#allocation2 + $0x78] sm:$0xf] %v337
    %370 = vst [vmem:[#allocation2 + $0x7c] sm:$0xf] %v338
    // Predicated region
    $region14: #{tpu_custom_call.1} parent=1 // pred_check
      _
    $region15: #{tpu_custom_call.1} parent=1 // pred_check_branch
      %372 = sbr.rel (0) target = $region17
    $region16: #{tpu_custom_call.1} parent=1 // pred_region
      %374 = vsyncadd [#allocation3], 0
      %s375 = sshll.u32 [#allocation2], 4
      %s376 = int_to_ptr.vmem [resolvable:$true] %s375
      %s377 = sshll.u32 %s3, 4
      %s378 = int_to_ptr.hbm [resolvable:$true] %s377
      %383 = dma.vmem_to_hbm [thread:$0]  %s376, 2048, %s378, [#allocation3], 64, 64, 4
    $region17: #{tpu_custom_call.1} parent=1 // pred_fallthru
      _
    // Predicated region
    $region18: #{tpu_custom_call.1} parent=1 // pred_check
      _
    $region19: #{tpu_custom_call.1} parent=1 // pred_check_branch
      %385 = sbr.rel (0) target = $region21
    $region20: #{tpu_custom_call.1} parent=1 // pred_region
      %387 = dma.done [#allocation3], 2048
    $region21: #{tpu_custom_call.1} parent=1 // pred_fallthru
      _
    %388 = vsyncpa [#allocation3], 1

</llo_original>
